<compile_context>
chip_gen: v6e
topology: v6e:2x2x1
jax: 0.10.0
libtpu: 0.0.40
codegen_flags: <defaults>
</compile_context>

<pallas_src>
import functools

import jax
import jax.numpy as jnp
from jax.experimental import pallas as pl
from jax.experimental.pallas import tpu as pltpu


def _se_kernel(params_ref, x_ref, o_ref, *, half, hw):
    # params_ref: (8, 8)        packed [fc1_w.T; fc1_b; fc2_w; fc2_b]
    # x_ref:      (2, half, hw) whole input, halves split on the leading axis
    # o_ref:      (2, half, hw) whole output
    inv = jnp.float32(1.0 / (half * hw))

    # --- global-average pooling of each channel half (sublane-first reduce) ---
    row_lo = jnp.sum(x_ref[0], axis=0, keepdims=True)           # (1, hw)  VPU
    row_hi = jnp.sum(x_ref[1], axis=0, keepdims=True)           # (1, hw)  VPU
    s1 = jnp.sum(row_lo, axis=1, keepdims=True) * inv           # (1, 1)   XLU
    s2 = jnp.sum(row_hi, axis=1, keepdims=True) * inv           # (1, 1)   XLU

    # --- tiny 2 -> 8 -> 2 MLP + sigmoid gate (kept on VPU/EUP, not MXU) ---
    w1t = params_ref[0:2, :]                                    # (2, 8) fc1.weight.T
    b1 = params_ref[2:3, :]                                     # (1, 8) fc1.bias
    w2 = params_ref[3:5, :]                                     # (2, 8) fc2.weight
    b2 = params_ref[5:7, 0:1]                                   # (2, 1) fc2.bias
    h = jnp.maximum(s1 * w1t[0:1, :] + s2 * w1t[1:2, :] + b1, 0.0)   # (1, 8)
    g = jax.nn.sigmoid(jnp.sum(w2 * h, axis=1, keepdims=True) + b2)  # (2, 1)

    # --- gate each half (re-read from VMEM so x is never spilled as a value) ---
    o_ref[0] = x_ref[0] * g[0:1, 0:1]
    o_ref[1] = x_ref[1] * g[1:2, 0:1]


def _vmem_capacity_bytes():
    """Physical VMEM per TensorCore; clamp requests so v7x (64 MiB) never over-asks."""
    try:
        info = pltpu.get_tpu_info()
        cap = getattr(info, "vmem_capacity_bytes", None)
        if cap:
            return int(cap)
    except Exception:
        pass
    return 64 * 1024 * 1024  # v7x floor; safe on every generation


@jax.jit
def se_block_forward(x, fc1_w, fc1_b, fc2_w, fc2_b):
    # x: (1, C, H, W) float32, C even.  Handles all planes branches (50..800).
    n, c, h, w = x.shape
    assert n == 1, "PyTorch forward uses .item(): batch must be 1"
    assert c % 2 == 0
    half = c // 2
    hw = h * w
    x3d = x.reshape(2, half, hw)

    # Pack the four tiny FC parameters into one (8, 8) block -> a single small DMA.
    params = jnp.zeros((8, 8), jnp.float32)
    params = params.at[0:2, :].set(fc1_w.T.astype(jnp.float32))
    params = params.at[2, :].set(fc1_b.astype(jnp.float32))
    params = params.at[3:5, :].set(fc2_w.astype(jnp.float32))
    params = params.at[5:7, 0].set(fc2_b.astype(jnp.float32))

    # VMEM budget: (input + output) x potential double-buffering + headroom,
    # clamped to the chip's physical capacity.
    x_bytes = 2 * half * hw * jnp.dtype(x.dtype).itemsize
    needed = 4 * x_bytes + (1 << 20)
    vmem_limit = min(_vmem_capacity_bytes(), max(needed, 16 * 1024 * 1024))

    kernel = functools.partial(_se_kernel, half=half, hw=hw)

    out3d = pl.pallas_call(
        kernel,
        out_shape=jax.ShapeDtypeStruct((2, half, hw), x.dtype),
        grid_spec=pltpu.PrefetchScalarGridSpec(
            num_scalar_prefetch=0,
            grid=(1,),  # single pass: whole x resident in VMEM
            in_specs=[
                pl.BlockSpec((8, 8), lambda i: (0, 0)),            # packed params
                pl.BlockSpec((2, half, hw), lambda i: (0, 0, 0)),  # whole x
            ],
            out_specs=pl.BlockSpec((2, half, hw), lambda i: (0, 0, 0)),
        ),
        compiler_params=pltpu.CompilerParams(
            dimension_semantics=("arbitrary",),
            vmem_limit_bytes=int(vmem_limit),
        ),
    )(params, x3d)
    return out3d.reshape(n, c, h, w)


def _reference(x, fc1_w, fc1_b, fc2_w, fc2_b):
    c = x.shape[1]
    half = c // 2
    s = jnp.stack([jnp.mean(x[:, :half]), jnp.mean(x[:, half:])])   # (2,)
    hdd = jnp.maximum(fc1_w @ s + fc1_b, 0.0)                       # (8,)
    g = jax.nn.sigmoid(fc2_w @ hdd + fc2_b)                         # (2,)
    return jnp.concatenate([g[0] * x[:, :half], g[1] * x[:, half:]], axis=1)


def _run_case(planes, hh, ww, key):
    kx, k1, k2, k3, k4 = jax.random.split(key, 5)
    x = jax.random.normal(kx, (1, planes, hh, ww), dtype=jnp.float32)
    fc1_w = jax.random.normal(k1, (8, 2), dtype=jnp.float32) * 0.5
    fc1_b = jax.random.normal(k2, (8,), dtype=jnp.float32) * 0.1
    fc2_w = jax.random.normal(k3, (2, 8), dtype=jnp.float32) * 0.5
    fc2_b = jax.random.normal(k4, (2,), dtype=jnp.float32) * 0.1

    ref = _reference(x, fc1_w, fc1_b, fc2_w, fc2_b)
    out = jax.block_until_ready(se_block_forward(x, fc1_w, fc1_b, fc2_w, fc2_b))
    assert out.shape == x.shape
    assert jnp.allclose(out, ref, atol=1e-5, rtol=1e-5), (
        f"mismatch vs reference (planes={planes}, H=W={hh})")


if __name__ == "__main__":
    key = jax.random.PRNGKey(0)
    k_a, k_b, k_c = jax.random.split(key, 3)

    # planes=800 branch -> AvgPool3d((400, 16, 16)): C=800, H=W=16, batch=1.
    _run_case(800, 16, 16, k_a)
    # planes=400 branch -> AvgPool3d((200, 32, 32)): C=400, H=W=32, batch=1.
    _run_case(400, 32, 32, k_b)
    # Odd half (C//2 not a multiple of 8) to exercise the generalized layout
    # that the small-planes branches (50/100/200) rely on, at a tiny spatial size.
    _run_case(36, 16, 16, k_c)

    print("KERNEL_OK")
</pallas_src>

<mosaic_0001>
module attributes {stable_mosaic.version = 11 : i64} {
  func.func @_se_kernel(%arg0: i32, %arg1: memref<8x8xf32, #tpu.memory_space<vmem>>, %arg2: memref<2x400x256xf32, #tpu.memory_space<vmem>>, %arg3: memref<2x400x256xf32, #tpu.memory_space<vmem>>) attributes {dimension_semantics = [#tpu.dimension_semantics<arbitrary>], iteration_bounds = array<i64: 1>, scalar_prefetch = 0 : i64, scratch_operands = 0 : i64, tpu.core_type = #tpu.core_type<tc>, window_params = [{pipeline_mode = #tpu.pipeline_mode<synchronous>, transform_indices = @transform_0, window_bounds = array<i64: 8, 8>}, {pipeline_mode = #tpu.pipeline_mode<synchronous>, transform_indices = @transform_1, window_bounds = array<i64: 2, 400, 256>}, {pipeline_mode = #tpu.pipeline_mode<synchronous>, transform_indices = @transform_2, window_bounds = array<i64: 2, 400, 256>}]} {
    %c0 = arith.constant 0 : index
    %c0_0 = arith.constant 0 : index
    %c0_1 = arith.constant 0 : index
    %0 = vector.load %arg2[%c0, %c0_0, %c0_1] : memref<2x400x256xf32, #tpu.memory_space<vmem>>, vector<1x400x256xf32>
    %1 = vector.shape_cast %0 : vector<1x400x256xf32> to vector<400x256xf32>
    %cst = arith.constant dense<0.000000e+00> : vector<256xf32>
    %2 = vector.multi_reduction <add>, %1, %cst [0] : vector<400x256xf32> to vector<256xf32>
    %3 = vector.shape_cast %2 : vector<256xf32> to vector<1x256xf32>
    %c1 = arith.constant 1 : index
    %c0_2 = arith.constant 0 : index
    %c0_3 = arith.constant 0 : index
    %4 = vector.load %arg2[%c1, %c0_2, %c0_3] : memref<2x400x256xf32, #tpu.memory_space<vmem>>, vector<1x400x256xf32>
    %5 = vector.shape_cast %4 : vector<1x400x256xf32> to vector<400x256xf32>
    %cst_4 = arith.constant dense<0.000000e+00> : vector<256xf32>
    %6 = vector.multi_reduction <add>, %5, %cst_4 [0] : vector<400x256xf32> to vector<256xf32>
    %7 = vector.shape_cast %6 : vector<256xf32> to vector<1x256xf32>
    %cst_5 = arith.constant dense<0.000000e+00> : vector<1xf32>
    %8 = vector.multi_reduction <add>, %3, %cst_5 [1] : vector<1x256xf32> to vector<1xf32>
    %9 = vector.shape_cast %8 : vector<1xf32> to vector<1x1xf32>
    %cst_6 = arith.constant 9.76562478E-6 : f32
    %10 = vector.broadcast %cst_6 : f32 to vector<1x1xf32>
    %11 = arith.mulf %9, %10 : vector<1x1xf32>
    %cst_7 = arith.constant dense<0.000000e+00> : vector<1xf32>
    %12 = vector.multi_reduction <add>, %7, %cst_7 [1] : vector<1x256xf32> to vector<1xf32>
    %13 = vector.shape_cast %12 : vector<1xf32> to vector<1x1xf32>
    %cst_8 = arith.constant 9.76562478E-6 : f32
    %14 = vector.broadcast %cst_8 : f32 to vector<1x1xf32>
    %15 = arith.mulf %13, %14 : vector<1x1xf32>
    %c0_9 = arith.constant 0 : index
    %c0_10 = arith.constant 0 : index
    %16 = vector.load %arg1[%c0_9, %c0_10] : memref<8x8xf32, #tpu.memory_space<vmem>>, vector<2x8xf32>
    %c2 = arith.constant 2 : index
    %c0_11 = arith.constant 0 : index
    %17 = vector.load %arg1[%c2, %c0_11] : memref<8x8xf32, #tpu.memory_space<vmem>>, vector<1x8xf32>
    %c3 = arith.constant 3 : index
    %c0_12 = arith.constant 0 : index
    %18 = vector.load %arg1[%c3, %c0_12] : memref<8x8xf32, #tpu.memory_space<vmem>>, vector<2x8xf32>
    %c5 = arith.constant 5 : index
    %c0_13 = arith.constant 0 : index
    %19 = vector.load %arg1[%c5, %c0_13] : memref<8x8xf32, #tpu.memory_space<vmem>>, vector<2x1xf32>
    %20 = vector.extract_strided_slice %16 {offsets = [0, 0], sizes = [1, 8], strides = [1, 1]} : vector<2x8xf32> to vector<1x8xf32>
    %21 = vector.broadcast %11 : vector<1x1xf32> to vector<1x8xf32>
    %22 = arith.mulf %21, %20 : vector<1x8xf32>
    %23 = vector.extract_strided_slice %16 {offsets = [1, 0], sizes = [1, 8], strides = [1, 1]} : vector<2x8xf32> to vector<1x8xf32>
    %24 = vector.broadcast %15 : vector<1x1xf32> to vector<1x8xf32>
    %25 = arith.mulf %24, %23 : vector<1x8xf32>
    %26 = arith.addf %22, %25 : vector<1x8xf32>
    %27 = arith.addf %26, %17 : vector<1x8xf32>
    %cst_14 = arith.constant 0.000000e+00 : f32
    %28 = vector.broadcast %cst_14 : f32 to vector<1x8xf32>
    %29 = arith.maximumf %27, %28 : vector<1x8xf32>
    %30 = vector.broadcast %29 : vector<1x8xf32> to vector<2x8xf32>
    %31 = arith.mulf %18, %30 : vector<2x8xf32>
    %cst_15 = arith.constant dense<0.000000e+00> : vector<2xf32>
    %32 = vector.multi_reduction <add>, %31, %cst_15 [1] : vector<2x8xf32> to vector<2xf32>
    %33 = vector.shape_cast %32 : vector<2xf32> to vector<2x1xf32>
    %34 = arith.addf %33, %19 : vector<2x1xf32>
    %35 = arith.negf %34 : vector<2x1xf32>
    %36 = math.exp %35 : vector<2x1xf32>
    %cst_16 = arith.constant 1.000000e+00 : f32
    %37 = vector.broadcast %cst_16 : f32 to vector<2x1xf32>
    %38 = arith.addf %37, %36 : vector<2x1xf32>
    %39 = arith.divf %37, %38 : vector<2x1xf32>
    %c0_17 = arith.constant 0 : index
    %c0_18 = arith.constant 0 : index
    %c0_19 = arith.constant 0 : index
    %40 = vector.load %arg2[%c0_17, %c0_18, %c0_19] : memref<2x400x256xf32, #tpu.memory_space<vmem>>, vector<1x400x256xf32>
    %41 = vector.shape_cast %40 : vector<1x400x256xf32> to vector<400x256xf32>
    %42 = vector.extract_strided_slice %39 {offsets = [0, 0], sizes = [1, 1], strides = [1, 1]} : vector<2x1xf32> to vector<1x1xf32>
    %43 = vector.broadcast %42 : vector<1x1xf32> to vector<400x256xf32>
    %44 = arith.mulf %41, %43 : vector<400x256xf32>
    %c0_20 = arith.constant 0 : index
    %c0_21 = arith.constant 0 : index
    %c0_22 = arith.constant 0 : index
    %45 = vector.load %arg3[%c0_20, %c0_21, %c0_22] : memref<2x400x256xf32, #tpu.memory_space<vmem>>, vector<1x400x256xf32>
    %46 = vector.shape_cast %45 : vector<1x400x256xf32> to vector<400x256xf32>
    %47 = vector.shape_cast %44 : vector<400x256xf32> to vector<1x400x256xf32>
    tpu.vector_store %arg3[%c0_20, %c0_21, %c0_22], %47 {strides = array<i32>} : memref<2x400x256xf32, #tpu.memory_space<vmem>>, vector<1x400x256xf32>,
    %c1_23 = arith.constant 1 : index
    %c0_24 = arith.constant 0 : index
    %c0_25 = arith.constant 0 : index
    %48 = vector.load %arg2[%c1_23, %c0_24, %c0_25] : memref<2x400x256xf32, #tpu.memory_space<vmem>>, vector<1x400x256xf32>
    %49 = vector.shape_cast %48 : vector<1x400x256xf32> to vector<400x256xf32>
    %50 = vector.extract_strided_slice %39 {offsets = [1, 0], sizes = [1, 1], strides = [1, 1]} : vector<2x1xf32> to vector<1x1xf32>
    %51 = vector.broadcast %50 : vector<1x1xf32> to vector<400x256xf32>
    %52 = arith.mulf %49, %51 : vector<400x256xf32>
    %c1_26 = arith.constant 1 : index
    %c0_27 = arith.constant 0 : index
    %c0_28 = arith.constant 0 : index
    %53 = vector.load %arg3[%c1_26, %c0_27, %c0_28] : memref<2x400x256xf32, #tpu.memory_space<vmem>>, vector<1x400x256xf32>
    %54 = vector.shape_cast %53 : vector<1x400x256xf32> to vector<400x256xf32>
    %55 = vector.shape_cast %52 : vector<400x256xf32> to vector<1x400x256xf32>
    tpu.vector_store %arg3[%c1_26, %c0_27, %c0_28], %55 {strides = array<i32>} : memref<2x400x256xf32, #tpu.memory_space<vmem>>, vector<1x400x256xf32>,
    return
  }
  func.func @transform_0(%arg0: i32) -> (i32, i32) {
    %c0_i32 = arith.constant 0 : i32
    %c0_i32_0 = arith.constant 0 : i32
    %c0_i32_1 = arith.constant 0 : i32
    return %c0_i32, %c0_i32_0 : i32, i32
  }
  func.func @transform_1(%arg0: i32) -> (i32, i32, i32) {
    %c0_i32 = arith.constant 0 : i32
    %c0_i32_0 = arith.constant 0 : i32
    %c0_i32_1 = arith.constant 0 : i32
    %c0_i32_2 = arith.constant 0 : i32
    return %c0_i32, %c0_i32_0, %c0_i32_1 : i32, i32, i32
  }
  func.func @transform_2(%arg0: i32) -> (i32, i32, i32) {
    %c0_i32 = arith.constant 0 : i32
    %c0_i32_0 = arith.constant 0 : i32
    %c0_i32_1 = arith.constant 0 : i32
    %c0_i32_2 = arith.constant 0 : i32
    return %c0_i32, %c0_i32_0, %c0_i32_1 : i32, i32, i32
  }
}

</mosaic_0001>

<llo_original>
// kernel: se_block_forward.1
$region0: #{se_block_forward.1}
  #allocation0 [shape = 'u32[]', space=smem, size = 0x4, offset = 0x4, fixed_abs, tag = 'smem constant byte address 0x4 - core index']
  #allocation1 [shape = 'u32[144,128]{1,0:T(1,128)}', space=vmem, size = 0x12000, scoped, tag = 'internal scratch']
  %s0 = inlined_call_operand.vmem [shape: f32[8,8], index: 0, kind: input, shape index: {}]
  %s1 = inlined_call_operand.vmem [shape: f32[2,400,256], index: 1, kind: input, shape index: {}]
  %s2 = inlined_call_operand.vmem [shape: f32[2,400,256], index: 2, kind: output, shape index: {}]
  %s3 = sld [smem:[#allocation0]]
  $region18: #{se_block_forward.1} parent=0
    _
  %s5 = ssub.s32 1, %s3
  %s6 = scalar_select 0, %s5, %s3
  // Predicated region
  $region2: #{se_block_forward.1} parent=0 // pred_check
    _
  $region3: #{se_block_forward.1} parent=0 // pred_check_branch
    %8 = sbr.rel (0) target = $region5
  $region4: #{se_block_forward.1} parent=0 // pred_region
    _
  $region5: #{se_block_forward.1} parent=0 // pred_fallthru
    _
  // Predicated region
  $region6: #{se_block_forward.1} parent=0 // pred_check
    _
  $region7: #{se_block_forward.1} parent=0 // pred_check_branch
    %10 = sbr.rel (0) target = $region9
  $region8: #{se_block_forward.1} parent=0 // pred_region
    _
  $region9: #{se_block_forward.1} parent=0 // pred_fallthru
    _
  %v11 = vld [vmem:[%s1] sm:$0xff]
  %v12 = vld [vmem:[%s1 + $0x8] sm:$0xff]
  %v13 = vld [vmem:[%s1 + $0x10] sm:$0xff]
  %v14 = vld [vmem:[%s1 + $0x18] sm:$0xff]
  %v15 = vld [vmem:[%s1 + $0x20] sm:$0xff]
  %v16 = vld [vmem:[%s1 + $0x28] sm:$0xff]
  %v17 = vld [vmem:[%s1 + $0x30] sm:$0xff]
  %v18 = vld [vmem:[%s1 + $0x38] sm:$0xff]
  %v19 = vld [vmem:[%s1 + $0x40] sm:$0xff]
  %v20 = vld [vmem:[%s1 + $0x48] sm:$0xff]
  %v21 = vld [vmem:[%s1 + $0x50] sm:$0xff]
  %v22 = vld [vmem:[%s1 + $0x58] sm:$0xff]
  %v23 = vld [vmem:[%s1 + $0x60] sm:$0xff]
  %v24 = vld [vmem:[%s1 + $0x68] sm:$0xff]
  %v25 = vld [vmem:[%s1 + $0x70] sm:$0xff]
  %v26 = vld [vmem:[%s1 + $0x78] sm:$0xff]
  %v27 = vld [vmem:[%s1 + $0x80] sm:$0xff]
  %v28 = vld [vmem:[%s1 + $0x88] sm:$0xff]
  %v29 = vld [vmem:[%s1 + $0x90] sm:$0xff]
  %v30 = vld [vmem:[%s1 + $0x98] sm:$0xff]
  %v31 = vld [vmem:[%s1 + $0xa0] sm:$0xff]
  %v32 = vld [vmem:[%s1 + $0xa8] sm:$0xff]
  %v33 = vld [vmem:[%s1 + $0xb0] sm:$0xff]
  %v34 = vld [vmem:[%s1 + $0xb8] sm:$0xff]
  %v35 = vld [vmem:[%s1 + $0xc0] sm:$0xff]
  %v36 = vld [vmem:[%s1 + $0xc8] sm:$0xff]
  %v37 = vld [vmem:[%s1 + $0xd0] sm:$0xff]
  %v38 = vld [vmem:[%s1 + $0xd8] sm:$0xff]
  %v39 = vld [vmem:[%s1 + $0xe0] sm:$0xff]
  %v40 = vld [vmem:[%s1 + $0xe8] sm:$0xff]
  %v41 = vld [vmem:[%s1 + $0xf0] sm:$0xff]
  %v42 = vld [vmem:[%s1 + $0xf8] sm:$0xff]
  %v43 = vld [vmem:[%s1 + $0x100] sm:$0xff]
  %v44 = vld [vmem:[%s1 + $0x108] sm:$0xff]
  %v45 = vld [vmem:[%s1 + $0x110] sm:$0xff]
  %v46 = vld [vmem:[%s1 + $0x118] sm:$0xff]
  %v47 = vld [vmem:[%s1 + $0x120] sm:$0xff]
  %v48 = vld [vmem:[%s1 + $0x128] sm:$0xff]
  %v49 = vld [vmem:[%s1 + $0x130] sm:$0xff]
  %v50 = vld [vmem:[%s1 + $0x138] sm:$0xff]
  %v51 = vld [vmem:[%s1 + $0x140] sm:$0xff]
  %v52 = vld [vmem:[%s1 + $0x148] sm:$0xff]
  %v53 = vld [vmem:[%s1 + $0x150] sm:$0xff]
  %v54 = vld [vmem:[%s1 + $0x158] sm:$0xff]
  %v55 = vld [vmem:[%s1 + $0x160] sm:$0xff]
  %v56 = vld [vmem:[%s1 + $0x168] sm:$0xff]
  %v57 = vld [vmem:[%s1 + $0x170] sm:$0xff]
  %v58 = vld [vmem:[%s1 + $0x178] sm:$0xff]
  %v59 = vld [vmem:[%s1 + $0x180] sm:$0xff]
  %v60 = vld [vmem:[%s1 + $0x188] sm:$0xff]
  %v61 = vld [vmem:[%s1 + $0x190] sm:$0xff]
  %v62 = vld [vmem:[%s1 + $0x198] sm:$0xff]
  %v63 = vld [vmem:[%s1 + $0x1a0] sm:$0xff]
  %v64 = vld [vmem:[%s1 + $0x1a8] sm:$0xff]
  %v65 = vld [vmem:[%s1 + $0x1b0] sm:$0xff]
  %v66 = vld [vmem:[%s1 + $0x1b8] sm:$0xff]
  %v67 = vld [vmem:[%s1 + $0x1c0] sm:$0xff]
  %v68 = vld [vmem:[%s1 + $0x1c8] sm:$0xff]
  %v69 = vld [vmem:[%s1 + $0x1d0] sm:$0xff]
  %v70 = vld [vmem:[%s1 + $0x1d8] sm:$0xff]
  %v71 = vld [vmem:[%s1 + $0x1e0] sm:$0xff]
  %v72 = vld [vmem:[%s1 + $0x1e8] sm:$0xff]
  %v73 = vld [vmem:[%s1 + $0x1f0] sm:$0xff]
  %v74 = vld [vmem:[%s1 + $0x1f8] sm:$0xff]
  %v75 = vld [vmem:[%s1 + $0x200] sm:$0xff]
  %v76 = vld [vmem:[%s1 + $0x208] sm:$0xff]
  %v77 = vld [vmem:[%s1 + $0x210] sm:$0xff]
  %v78 = vld [vmem:[%s1 + $0x218] sm:$0xff]
  %v79 = vld [vmem:[%s1 + $0x220] sm:$0xff]
  %v80 = vld [vmem:[%s1 + $0x228] sm:$0xff]
  %v81 = vld [vmem:[%s1 + $0x230] sm:$0xff]
  %v82 = vld [vmem:[%s1 + $0x238] sm:$0xff]
  %v83 = vld [vmem:[%s1 + $0x240] sm:$0xff]
  %v84 = vld [vmem:[%s1 + $0x248] sm:$0xff]
  %v85 = vld [vmem:[%s1 + $0x250] sm:$0xff]
  %v86 = vld [vmem:[%s1 + $0x258] sm:$0xff]
  %v87 = vld [vmem:[%s1 + $0x260] sm:$0xff]
  %v88 = vld [vmem:[%s1 + $0x268] sm:$0xff]
  %v89 = vld [vmem:[%s1 + $0x270] sm:$0xff]
  %v90 = vld [vmem:[%s1 + $0x278] sm:$0xff]
  %v91 = vld [vmem:[%s1 + $0x280] sm:$0xff]
  %v92 = vld [vmem:[%s1 + $0x288] sm:$0xff]
  %v93 = vld [vmem:[%s1 + $0x290] sm:$0xff]
  %v94 = vld [vmem:[%s1 + $0x298] sm:$0xff]
  %v95 = vld [vmem:[%s1 + $0x2a0] sm:$0xff]
  %v96 = vld [vmem:[%s1 + $0x2a8] sm:$0xff]
  %v97 = vld [vmem:[%s1 + $0x2b0] sm:$0xff]
  %v98 = vld [vmem:[%s1 + $0x2b8] sm:$0xff]
  %v99 = vld [vmem:[%s1 + $0x2c0] sm:$0xff]
  %v100 = vld [vmem:[%s1 + $0x2c8] sm:$0xff]
  %v101 = vld [vmem:[%s1 + $0x2d0] sm:$0xff]
  %v102 = vld [vmem:[%s1 + $0x2d8] sm:$0xff]
  %v103 = vld [vmem:[%s1 + $0x2e0] sm:$0xff]
  %v104 = vld [vmem:[%s1 + $0x2e8] sm:$0xff]
  %v105 = vld [vmem:[%s1 + $0x2f0] sm:$0xff]
  %v106 = vld [vmem:[%s1 + $0x2f8] sm:$0xff]
  %v107 = vld [vmem:[%s1 + $0x300] sm:$0xff]
  %v108 = vld [vmem:[%s1 + $0x308] sm:$0xff]
  %v109 = vld [vmem:[%s1 + $0x310] sm:$0xff]
  %v110 = vld [vmem:[%s1 + $0x318] sm:$0xff]
  %v111 = vadd.f32 %v11, %v13
  %v112 = vadd.f32 %v111, %v15
  %v113 = vadd.f32 %v112, %v17
  %v114 = vadd.f32 %v113, %v19
  %v115 = vadd.f32 %v114, %v21
  %v116 = vadd.f32 %v115, %v23
  %v117 = vadd.f32 %v116, %v25
  %v118 = vadd.f32 %v117, %v27
  %v119 = vadd.f32 %v118, %v29
  %v120 = vadd.f32 %v119, %v31
  %v121 = vadd.f32 %v120, %v33
  %v122 = vadd.f32 %v121, %v35
  %v123 = vadd.f32 %v122, %v37
  %v124 = vadd.f32 %v123, %v39
  %v125 = vadd.f32 %v124, %v41
  %v126 = vadd.f32 %v125, %v43
  %v127 = vadd.f32 %v126, %v45
  %v128 = vadd.f32 %v127, %v47
  %v129 = vadd.f32 %v128, %v49
  %v130 = vadd.f32 %v129, %v51
  %v131 = vadd.f32 %v130, %v53
  %v132 = vadd.f32 %v131, %v55
  %v133 = vadd.f32 %v132, %v57
  %v134 = vadd.f32 %v133, %v59
  %v135 = vadd.f32 %v134, %v61
  %v136 = vadd.f32 %v135, %v63
  %v137 = vadd.f32 %v136, %v65
  %v138 = vadd.f32 %v137, %v67
  %v139 = vadd.f32 %v138, %v69
  %v140 = vadd.f32 %v139, %v71
  %v141 = vadd.f32 %v140, %v73
  %v142 = vadd.f32 %v141, %v75
  %v143 = vadd.f32 %v142, %v77
  %v144 = vadd.f32 %v143, %v79
  %v145 = vadd.f32 %v144, %v81
  %v146 = vadd.f32 %v145, %v83
  %v147 = vadd.f32 %v146, %v85
  %v148 = vadd.f32 %v147, %v87
  %v149 = vadd.f32 %v148, %v89
  %v150 = vadd.f32 %v149, %v91
  %v151 = vadd.f32 %v150, %v93
  %v152 = vadd.f32 %v151, %v95
  %v153 = vadd.f32 %v152, %v97
  %v154 = vadd.f32 %v153, %v99
  %v155 = vadd.f32 %v154, %v101
  %v156 = vadd.f32 %v155, %v103
  %v157 = vadd.f32 %v156, %v105
  %v158 = vadd.f32 %v157, %v107
  %v159 = vadd.f32 %v158, %v109
  %v160 = vrot.slane %v159, 4
  %v161 = vadd.f32 %v159, %v160
  %v162 = vrot.slane %v161, 2
  %v163 = vadd.f32 %v161, %v162
  %v164 = vrot.slane %v163, 1
  %v165 = vadd.f32 %v163, %v164
  %v166 = vadd.f32 %v12, %v14
  %v167 = vadd.f32 %v166, %v16
  %v168 = vadd.f32 %v167, %v18
  %v169 = vadd.f32 %v168, %v20
  %v170 = vadd.f32 %v169, %v22
  %v171 = vadd.f32 %v170, %v24
  %v172 = vadd.f32 %v171, %v26
  %v173 = vadd.f32 %v172, %v28
  %v174 = vadd.f32 %v173, %v30
  %v175 = vadd.f32 %v174, %v32
  %v176 = vadd.f32 %v175, %v34
  %v177 = vadd.f32 %v176, %v36
  %v178 = vadd.f32 %v177, %v38
  %v179 = vadd.f32 %v178, %v40
  %v180 = vadd.f32 %v179, %v42
  %v181 = vadd.f32 %v180, %v44
  %v182 = vadd.f32 %v181, %v46
  %v183 = vadd.f32 %v182, %v48
  %v184 = vadd.f32 %v183, %v50
  %v185 = vadd.f32 %v184, %v52
  %v186 = vadd.f32 %v185, %v54
  %v187 = vadd.f32 %v186, %v56
  %v188 = vadd.f32 %v187, %v58
  %v189 = vadd.f32 %v188, %v60
  %v190 = vadd.f32 %v189, %v62
  %v191 = vadd.f32 %v190, %v64
  %v192 = vadd.f32 %v191, %v66
  %v193 = vadd.f32 %v192, %v68
  %v194 = vadd.f32 %v193, %v70
  %v195 = vadd.f32 %v194, %v72
  %v196 = vadd.f32 %v195, %v74
  %v197 = vadd.f32 %v196, %v76
  %v198 = vadd.f32 %v197, %v78
  %v199 = vadd.f32 %v198, %v80
  %v200 = vadd.f32 %v199, %v82
  %v201 = vadd.f32 %v200, %v84
  %v202 = vadd.f32 %v201, %v86
  %v203 = vadd.f32 %v202, %v88
  %v204 = vadd.f32 %v203, %v90
  %v205 = vadd.f32 %v204, %v92
  %v206 = vadd.f32 %v205, %v94
  %v207 = vadd.f32 %v206, %v96
  %v208 = vadd.f32 %v207, %v98
  %v209 = vadd.f32 %v208, %v100
  %v210 = vadd.f32 %v209, %v102
  %v211 = vadd.f32 %v210, %v104
  %v212 = vadd.f32 %v211, %v106
  %v213 = vadd.f32 %v212, %v108
  %v214 = vadd.f32 %v213, %v110
  %v215 = vrot.slane %v214, 4
  %v216 = vadd.f32 %v214, %v215
  %v217 = vrot.slane %v216, 2
  %v218 = vadd.f32 %v216, %v217
  %v219 = vrot.slane %v218, 1
  %v220 = vadd.f32 %v218, %v219
  %s221 = scalar_lea.vmem %s1, 800
  %v222 = vld [vmem:[%s221] sm:$0xff]
  %v223 = vld [vmem:[%s221 + $0x8] sm:$0xff]
  %v224 = vld [vmem:[%s221 + $0x10] sm:$0xff]
  %v225 = vld [vmem:[%s221 + $0x18] sm:$0xff]
  %v226 = vld [vmem:[%s221 + $0x20] sm:$0xff]
  %v227 = vld [vmem:[%s221 + $0x28] sm:$0xff]
  %v228 = vld [vmem:[%s221 + $0x30] sm:$0xff]
  %v229 = vld [vmem:[%s221 + $0x38] sm:$0xff]
  %v230 = vld [vmem:[%s221 + $0x40] sm:$0xff]
  %v231 = vld [vmem:[%s221 + $0x48] sm:$0xff]
  %v232 = vld [vmem:[%s221 + $0x50] sm:$0xff]
  %v233 = vld [vmem:[%s221 + $0x58] sm:$0xff]
  %v234 = vld [vmem:[%s221 + $0x60] sm:$0xff]
  %v235 = vld [vmem:[%s221 + $0x68] sm:$0xff]
  %v236 = vld [vmem:[%s221 + $0x70] sm:$0xff]
  %v237 = vld [vmem:[%s221 + $0x78] sm:$0xff]
  %v238 = vld [vmem:[%s221 + $0x80] sm:$0xff]
  %v239 = vld [vmem:[%s221 + $0x88] sm:$0xff]
  %v240 = vld [vmem:[%s221 + $0x90] sm:$0xff]
  %v241 = vld [vmem:[%s221 + $0x98] sm:$0xff]
  %v242 = vld [vmem:[%s221 + $0xa0] sm:$0xff]
  %v243 = vld [vmem:[%s221 + $0xa8] sm:$0xff]
  %v244 = vld [vmem:[%s221 + $0xb0] sm:$0xff]
  %v245 = vld [vmem:[%s221 + $0xb8] sm:$0xff]
  %v246 = vld [vmem:[%s221 + $0xc0] sm:$0xff]
  %v247 = vld [vmem:[%s221 + $0xc8] sm:$0xff]
  %v248 = vld [vmem:[%s221 + $0xd0] sm:$0xff]
  %v249 = vld [vmem:[%s221 + $0xd8] sm:$0xff]
  %v250 = vld [vmem:[%s221 + $0xe0] sm:$0xff]
  %v251 = vld [vmem:[%s221 + $0xe8] sm:$0xff]
  %v252 = vld [vmem:[%s221 + $0xf0] sm:$0xff]
  %v253 = vld [vmem:[%s221 + $0xf8] sm:$0xff]
  %v254 = vld [vmem:[%s221 + $0x100] sm:$0xff]
  %v255 = vld [vmem:[%s221 + $0x108] sm:$0xff]
  %v256 = vld [vmem:[%s221 + $0x110] sm:$0xff]
  %v257 = vld [vmem:[%s221 + $0x118] sm:$0xff]
  %v258 = vld [vmem:[%s221 + $0x120] sm:$0xff]
  %v259 = vld [vmem:[%s221 + $0x128] sm:$0xff]
  %v260 = vld [vmem:[%s221 + $0x130] sm:$0xff]
  %v261 = vld [vmem:[%s221 + $0x138] sm:$0xff]
  %v262 = vld [vmem:[%s221 + $0x140] sm:$0xff]
  %v263 = vld [vmem:[%s221 + $0x148] sm:$0xff]
  %v264 = vld [vmem:[%s221 + $0x150] sm:$0xff]
  %v265 = vld [vmem:[%s221 + $0x158] sm:$0xff]
  %v266 = vld [vmem:[%s221 + $0x160] sm:$0xff]
  %v267 = vld [vmem:[%s221 + $0x168] sm:$0xff]
  %v268 = vld [vmem:[%s221 + $0x170] sm:$0xff]
  %v269 = vld [vmem:[%s221 + $0x178] sm:$0xff]
  %v270 = vld [vmem:[%s221 + $0x180] sm:$0xff]
  %v271 = vld [vmem:[%s221 + $0x188] sm:$0xff]
  %v272 = vld [vmem:[%s221 + $0x190] sm:$0xff]
  %v273 = vld [vmem:[%s221 + $0x198] sm:$0xff]
  %v274 = vld [vmem:[%s221 + $0x1a0] sm:$0xff]
  %v275 = vld [vmem:[%s221 + $0x1a8] sm:$0xff]
  %v276 = vld [vmem:[%s221 + $0x1b0] sm:$0xff]
  %v277 = vld [vmem:[%s221 + $0x1b8] sm:$0xff]
  %v278 = vld [vmem:[%s221 + $0x1c0] sm:$0xff]
  %v279 = vld [vmem:[%s221 + $0x1c8] sm:$0xff]
  %v280 = vld [vmem:[%s221 + $0x1d0] sm:$0xff]
  %v281 = vld [vmem:[%s221 + $0x1d8] sm:$0xff]
  %v282 = vld [vmem:[%s221 + $0x1e0] sm:$0xff]
  %v283 = vld [vmem:[%s221 + $0x1e8] sm:$0xff]
  %v284 = vld [vmem:[%s221 + $0x1f0] sm:$0xff]
  %v285 = vld [vmem:[%s221 + $0x1f8] sm:$0xff]
  %v286 = vld [vmem:[%s221 + $0x200] sm:$0xff]
  %v287 = vld [vmem:[%s221 + $0x208] sm:$0xff]
  %v288 = vld [vmem:[%s221 + $0x210] sm:$0xff]
  %v289 = vld [vmem:[%s221 + $0x218] sm:$0xff]
  %v290 = vld [vmem:[%s221 + $0x220] sm:$0xff]
  %v291 = vld [vmem:[%s221 + $0x228] sm:$0xff]
  %v292 = vld [vmem:[%s221 + $0x230] sm:$0xff]
  %v293 = vld [vmem:[%s221 + $0x238] sm:$0xff]
  %v294 = vld [vmem:[%s221 + $0x240] sm:$0xff]
  %v295 = vld [vmem:[%s221 + $0x248] sm:$0xff]
  %v296 = vld [vmem:[%s221 + $0x250] sm:$0xff]
  %v297 = vld [vmem:[%s221 + $0x258] sm:$0xff]
  %v298 = vld [vmem:[%s221 + $0x260] sm:$0xff]
  %v299 = vld [vmem:[%s221 + $0x268] sm:$0xff]
  %v300 = vld [vmem:[%s221 + $0x270] sm:$0xff]
  %v301 = vld [vmem:[%s221 + $0x278] sm:$0xff]
  %v302 = vld [vmem:[%s221 + $0x280] sm:$0xff]
  %v303 = vld [vmem:[%s221 + $0x288] sm:$0xff]
  %v304 = vld [vmem:[%s221 + $0x290] sm:$0xff]
  %v305 = vld [vmem:[%s221 + $0x298] sm:$0xff]
  %v306 = vld [vmem:[%s221 + $0x2a0] sm:$0xff]
  %v307 = vld [vmem:[%s221 + $0x2a8] sm:$0xff]
  %v308 = vld [vmem:[%s221 + $0x2b0] sm:$0xff]
  %v309 = vld [vmem:[%s221 + $0x2b8] sm:$0xff]
  %v310 = vld [vmem:[%s221 + $0x2c0] sm:$0xff]
  %v311 = vld [vmem:[%s221 + $0x2c8] sm:$0xff]
  %v312 = vld [vmem:[%s221 + $0x2d0] sm:$0xff]
  %v313 = vld [vmem:[%s221 + $0x2d8] sm:$0xff]
  %v314 = vld [vmem:[%s221 + $0x2e0] sm:$0xff]
  %v315 = vld [vmem:[%s221 + $0x2e8] sm:$0xff]
  %v316 = vld [vmem:[%s221 + $0x2f0] sm:$0xff]
  %v317 = vld [vmem:[%s221 + $0x2f8] sm:$0xff]
  %v318 = vld [vmem:[%s221 + $0x300] sm:$0xff]
  %v319 = vld [vmem:[%s221 + $0x308] sm:$0xff]
  %v320 = vld [vmem:[%s221 + $0x310] sm:$0xff]
  %v321 = vld [vmem:[%s221 + $0x318] sm:$0xff]
  %v322 = vadd.f32 %v222, %v224
  %v323 = vadd.f32 %v322, %v226
  %v324 = vadd.f32 %v323, %v228
  %v325 = vadd.f32 %v324, %v230
  %v326 = vadd.f32 %v325, %v232
  %v327 = vadd.f32 %v326, %v234
  %v328 = vadd.f32 %v327, %v236
  %v329 = vadd.f32 %v328, %v238
  %v330 = vadd.f32 %v329, %v240
  %v331 = vadd.f32 %v330, %v242
  %v332 = vadd.f32 %v331, %v244
  %v333 = vadd.f32 %v332, %v246
  %v334 = vadd.f32 %v333, %v248
  %v335 = vadd.f32 %v334, %v250
  %v336 = vadd.f32 %v335, %v252
  %v337 = vadd.f32 %v336, %v254
  %v338 = vadd.f32 %v337, %v256
  %v339 = vadd.f32 %v338, %v258
  %v340 = vadd.f32 %v339, %v260
  %v341 = vadd.f32 %v340, %v262
  %v342 = vadd.f32 %v341, %v264
  %v343 = vadd.f32 %v342, %v266
  %v344 = vadd.f32 %v343, %v268
  %v345 = vadd.f32 %v344, %v270
  %v346 = vadd.f32 %v345, %v272
  %v347 = vadd.f32 %v346, %v274
  %v348 = vadd.f32 %v347, %v276
  %v349 = vadd.f32 %v348, %v278
  %v350 = vadd.f32 %v349, %v280
  %v351 = vadd.f32 %v350, %v282
  %v352 = vadd.f32 %v351, %v284
  %v353 = vadd.f32 %v352, %v286
  %v354 = vadd.f32 %v353, %v288
  %v355 = vadd.f32 %v354, %v290
  %v356 = vadd.f32 %v355, %v292
  %v357 = vadd.f32 %v356, %v294
  %v358 = vadd.f32 %v357, %v296
  %v359 = vadd.f32 %v358, %v298
  %v360 = vadd.f32 %v359, %v300
  %v361 = vadd.f32 %v360, %v302
  %v362 = vadd.f32 %v361, %v304
  %v363 = vadd.f32 %v362, %v306
  %v364 = vadd.f32 %v363, %v308
  %v365 = vadd.f32 %v364, %v310
  %v366 = vadd.f32 %v365, %v312
  %v367 = vadd.f32 %v366, %v314
  %v368 = vadd.f32 %v367, %v316
  %v369 = vadd.f32 %v368, %v318
  %v370 = vadd.f32 %v369, %v320
  %v371 = vrot.slane %v370, 4
  %v372 = vadd.f32 %v370, %v371
  %v373 = vrot.slane %v372, 2
  %v374 = vadd.f32 %v372, %v373
  %v375 = vrot.slane %v374, 1
  %v376 = vadd.f32 %v374, %v375
  %v377 = vadd.f32 %v223, %v225
  %v378 = vadd.f32 %v377, %v227
  %v379 = vadd.f32 %v378, %v229
  %v380 = vadd.f32 %v379, %v231
  %v381 = vadd.f32 %v380, %v233
  %v382 = vadd.f32 %v381, %v235
  %v383 = vadd.f32 %v382, %v237
  %v384 = vadd.f32 %v383, %v239
  %v385 = vadd.f32 %v384, %v241
  %v386 = vadd.f32 %v385, %v243
  %v387 = vadd.f32 %v386, %v245
  %v388 = vadd.f32 %v387, %v247
  %v389 = vadd.f32 %v388, %v249
  %v390 = vadd.f32 %v389, %v251
  %v391 = vadd.f32 %v390, %v253
  %v392 = vadd.f32 %v391, %v255
  %v393 = vadd.f32 %v392, %v257
  %v394 = vadd.f32 %v393, %v259
  %v395 = vadd.f32 %v394, %v261
  %v396 = vadd.f32 %v395, %v263
  %v397 = vadd.f32 %v396, %v265
  %v398 = vadd.f32 %v397, %v267
  %v399 = vadd.f32 %v398, %v269
  %v400 = vadd.f32 %v399, %v271
  %v401 = vadd.f32 %v400, %v273
  %v402 = vadd.f32 %v401, %v275
  %v403 = vadd.f32 %v402, %v277
  %v404 = vadd.f32 %v403, %v279
  %v405 = vadd.f32 %v404, %v281
  %v406 = vadd.f32 %v405, %v283
  %v407 = vadd.f32 %v406, %v285
  %v408 = vadd.f32 %v407, %v287
  %v409 = vadd.f32 %v408, %v289
  %v410 = vadd.f32 %v409, %v291
  %v411 = vadd.f32 %v410, %v293
  %v412 = vadd.f32 %v411, %v295
  %v413 = vadd.f32 %v412, %v297
  %v414 = vadd.f32 %v413, %v299
  %v415 = vadd.f32 %v414, %v301
  %v416 = vadd.f32 %v415, %v303
  %v417 = vadd.f32 %v416, %v305
  %v418 = vadd.f32 %v417, %v307
  %v419 = vadd.f32 %v418, %v309
  %v420 = vadd.f32 %v419, %v311
  %v421 = vadd.f32 %v420, %v313
  %v422 = vadd.f32 %v421, %v315
  %v423 = vadd.f32 %v422, %v317
  %v424 = vadd.f32 %v423, %v319
  %v425 = vadd.f32 %v424, %v321
  %v426 = vrot.slane %v425, 4
  %v427 = vadd.f32 %v425, %v426
  %v428 = vrot.slane %v427, 2
  %v429 = vadd.f32 %v427, %v428
  %v430 = vrot.slane %v429, 1
  %v431 = vadd.f32 %v429, %v430
  %v432 = vadd.f32 %v165, %v220
  %433 = vadd.xlane.f32.xlu0 %v432
  %v434 = vpop.xlane.xlu0 %433
  %v435 = vmul.f32 %v434, 9.765625e-06
  %v436 = vadd.f32 %v376, %v431
  %437 = vadd.xlane.f32.xlu0 %v436
  %v438 = vpop.xlane.xlu0 %437
  %v439 = vmul.f32 %v438, 9.765625e-06
  %v440 = vld [vmem:[%s0] sm:$0x3]
  %v441 = vld [vmem:[%s0 + $0x2] sm:$0x1]
  %v442 = vld [vmem:[%s0 + $0x3] sm:$0x3]
  %v443 = vld [vmem:[%s0 + $0x5] sm:$0x3]
  %v444 = vmul.f32 %v435, %v440
  %v445 = vmul.f32 %v439, %v440
  %v447 = vrot.slane %v445, 1
  %v449 = vadd.f32 %v444, %v447
  %v450 = vadd.f32 %v449, %v441
  %v451 = vmax.f32 %v450, 0.0
  %v452 = vlaneseq
  %v453 = vshrl.u32 %v452, 7
  %v454 = vsub.s32 0, %v453
  %v455 = vrot.slane %v451, %v454
  %v456 = vmul.f32 %v442, %v455
  %vm457 = vcmask 58368
  %v458 = vsel %vm457, %v456, 0.0
  %459 = vadd.xlane.f32.xlu0 %v458
  %v460 = vpop.xlane.xlu0 %459
  %v461 = vadd.f32 %v460, %v443
  %v462 = vxor.u32 %v461, 2147483648
  %v463 = vmul.f32 %v462, 1.442695
  %v464 = vpow.pop %v463
  %v465 = vadd.f32 %v464, 1.0
  %v466 = vrcp.pop %v465
  %v467 = vmul.f32 1.0, %v466
  %s469 = vtos %v467
  %v470 = vstv %s469
  %v472 = vmul.f32 %v11, %v470
  %v473 = vmul.f32 %v12, %v470
  %v474 = vmul.f32 %v13, %v470
  %v475 = vmul.f32 %v14, %v470
  %v476 = vmul.f32 %v15, %v470
  %v477 = vmul.f32 %v16, %v470
  %v478 = vmul.f32 %v17, %v470
  %v479 = vmul.f32 %v18, %v470
  %v480 = vmul.f32 %v19, %v470
  %v481 = vmul.f32 %v20, %v470
  %v482 = vmul.f32 %v21, %v470
  %v483 = vmul.f32 %v22, %v470
  %v484 = vmul.f32 %v23, %v470
  %v485 = vmul.f32 %v24, %v470
  %v486 = vmul.f32 %v25, %v470
  %v487 = vmul.f32 %v26, %v470
  %v488 = vmul.f32 %v27, %v470
  %v489 = vmul.f32 %v28, %v470
  %v490 = vmul.f32 %v29, %v470
  %v491 = vmul.f32 %v30, %v470
  %v492 = vmul.f32 %v31, %v470
  %v493 = vmul.f32 %v32, %v470
  %v494 = vmul.f32 %v33, %v470
  %v495 = vmul.f32 %v34, %v470
  %v496 = vmul.f32 %v35, %v470
  %v497 = vmul.f32 %v36, %v470
  %v498 = vmul.f32 %v37, %v470
  %v499 = vmul.f32 %v38, %v470
  %v500 = vmul.f32 %v39, %v470
  %v501 = vmul.f32 %v40, %v470
  %v502 = vmul.f32 %v41, %v470
  %v503 = vmul.f32 %v42, %v470
  %v504 = vmul.f32 %v43, %v470
  %v505 = vmul.f32 %v44, %v470
  %v506 = vmul.f32 %v45, %v470
  %v507 = vmul.f32 %v46, %v470
  %v508 = vmul.f32 %v47, %v470
  %v509 = vmul.f32 %v48, %v470
  %v510 = vmul.f32 %v49, %v470
  %v511 = vmul.f32 %v50, %v470
  %v512 = vmul.f32 %v51, %v470
  %v513 = vmul.f32 %v52, %v470
  %v514 = vmul.f32 %v53, %v470
  %v515 = vmul.f32 %v54, %v470
  %v516 = vmul.f32 %v55, %v470
  %v517 = vmul.f32 %v56, %v470
  %v518 = vmul.f32 %v57, %v470
  %v519 = vmul.f32 %v58, %v470
  %v520 = vmul.f32 %v59, %v470
  %v521 = vmul.f32 %v60, %v470
  %v522 = vmul.f32 %v61, %v470
  %v523 = vmul.f32 %v62, %v470
  %v524 = vmul.f32 %v63, %v470
  %v525 = vmul.f32 %v64, %v470
  %v526 = vmul.f32 %v65, %v470
  %v527 = vmul.f32 %v66, %v470
  %v528 = vmul.f32 %v67, %v470
  %v529 = vmul.f32 %v68, %v470
  %v530 = vmul.f32 %v69, %v470
  %v531 = vmul.f32 %v70, %v470
  %v532 = vmul.f32 %v71, %v470
  %v533 = vmul.f32 %v72, %v470
  %v534 = vmul.f32 %v73, %v470
  %v535 = vmul.f32 %v74, %v470
  %v536 = vmul.f32 %v75, %v470
  %v537 = vmul.f32 %v76, %v470
  %v538 = vmul.f32 %v77, %v470
  %v539 = vmul.f32 %v78, %v470
  %v540 = vmul.f32 %v79, %v470
  %v541 = vmul.f32 %v80, %v470
  %v542 = vmul.f32 %v81, %v470
  %v543 = vmul.f32 %v82, %v470
  %v544 = vmul.f32 %v83, %v470
  %v545 = vmul.f32 %v84, %v470
  %v546 = vmul.f32 %v85, %v470
  %v547 = vmul.f32 %v86, %v470
  %v548 = vmul.f32 %v87, %v470
  %v549 = vmul.f32 %v88, %v470
  %v550 = vmul.f32 %v89, %v470
  %v551 = vmul.f32 %v90, %v470
  %v552 = vmul.f32 %v91, %v470
  %v553 = vmul.f32 %v92, %v470
  %v554 = vmul.f32 %v93, %v470
  %v555 = vmul.f32 %v94, %v470
  %v556 = vmul.f32 %v95, %v470
  %v557 = vmul.f32 %v96, %v470
  %v558 = vmul.f32 %v97, %v470
  %v559 = vmul.f32 %v98, %v470
  %v560 = vmul.f32 %v99, %v470
  %v561 = vmul.f32 %v100, %v470
  %v562 = vmul.f32 %v101, %v470
  %v563 = vmul.f32 %v102, %v470
  %v564 = vmul.f32 %v103, %v470
  %v565 = vmul.f32 %v104, %v470
  %v566 = vmul.f32 %v105, %v470
  %v567 = vmul.f32 %v106, %v470
  %v568 = vmul.f32 %v107, %v470
  %v569 = vmul.f32 %v108, %v470
  %v570 = vmul.f32 %v109, %v470
  %v571 = vmul.f32 %v110, %v470
  %572 = vst [vmem:[%s2] sm:$0xff] %v472
  %573 = vst [vmem:[%s2 + $0x8] sm:$0xff] %v473
  %574 = vst [vmem:[%s2 + $0x10] sm:$0xff] %v474
  %575 = vst [vmem:[%s2 + $0x18] sm:$0xff] %v475
  %576 = vst [vmem:[%s2 + $0x20] sm:$0xff] %v476
  %577 = vst [vmem:[%s2 + $0x28] sm:$0xff] %v477
  %578 = vst [vmem:[%s2 + $0x30] sm:$0xff] %v478
  %579 = vst [vmem:[%s2 + $0x38] sm:$0xff] %v479
  %580 = vst [vmem:[%s2 + $0x40] sm:$0xff] %v480
  %581 = vst [vmem:[%s2 + $0x48] sm:$0xff] %v481
  %582 = vst [vmem:[%s2 + $0x50] sm:$0xff] %v482
  %583 = vst [vmem:[%s2 + $0x58] sm:$0xff] %v483
  %584 = vst [vmem:[%s2 + $0x60] sm:$0xff] %v484
  %585 = vst [vmem:[%s2 + $0x68] sm:$0xff] %v485
  %586 = vst [vmem:[%s2 + $0x70] sm:$0xff] %v486
  %587 = vst [vmem:[%s2 + $0x78] sm:$0xff] %v487
  %588 = vst [vmem:[%s2 + $0x80] sm:$0xff] %v488
  %589 = vst [vmem:[%s2 + $0x88] sm:$0xff] %v489
  %590 = vst [vmem:[%s2 + $0x90] sm:$0xff] %v490
  %591 = vst [vmem:[%s2 + $0x98] sm:$0xff] %v491
  %592 = vst [vmem:[%s2 + $0xa0] sm:$0xff] %v492
  %593 = vst [vmem:[%s2 + $0xa8] sm:$0xff] %v493
  %594 = vst [vmem:[%s2 + $0xb0] sm:$0xff] %v494
  %595 = vst [vmem:[%s2 + $0xb8] sm:$0xff] %v495
  %596 = vst [vmem:[%s2 + $0xc0] sm:$0xff] %v496
  %597 = vst [vmem:[%s2 + $0xc8] sm:$0xff] %v497
  %598 = vst [vmem:[%s2 + $0xd0] sm:$0xff] %v498
  %599 = vst [vmem:[%s2 + $0xd8] sm:$0xff] %v499
  %600 = vst [vmem:[%s2 + $0xe0] sm:$0xff] %v500
  %601 = vst [vmem:[%s2 + $0xe8] sm:$0xff] %v501
  %602 = vst [vmem:[%s2 + $0xf0] sm:$0xff] %v502
  %603 = vst [vmem:[%s2 + $0xf8] sm:$0xff] %v503
  %604 = vst [vmem:[%s2 + $0x100] sm:$0xff] %v504
  %605 = vst [vmem:[%s2 + $0x108] sm:$0xff] %v505
  %606 = vst [vmem:[%s2 + $0x110] sm:$0xff] %v506
  %607 = vst [vmem:[%s2 + $0x118] sm:$0xff] %v507
  %608 = vst [vmem:[%s2 + $0x120] sm:$0xff] %v508
  %609 = vst [vmem:[%s2 + $0x128] sm:$0xff] %v509
  %610 = vst [vmem:[%s2 + $0x130] sm:$0xff] %v510
  %611 = vst [vmem:[%s2 + $0x138] sm:$0xff] %v511
  %612 = vst [vmem:[%s2 + $0x140] sm:$0xff] %v512
  %613 = vst [vmem:[%s2 + $0x148] sm:$0xff] %v513
  %614 = vst [vmem:[%s2 + $0x150] sm:$0xff] %v514
  %615 = vst [vmem:[%s2 + $0x158] sm:$0xff] %v515
  %616 = vst [vmem:[%s2 + $0x160] sm:$0xff] %v516
  %617 = vst [vmem:[%s2 + $0x168] sm:$0xff] %v517
  %618 = vst [vmem:[%s2 + $0x170] sm:$0xff] %v518
  %619 = vst [vmem:[%s2 + $0x178] sm:$0xff] %v519
  %620 = vst [vmem:[%s2 + $0x180] sm:$0xff] %v520
  %621 = vst [vmem:[%s2 + $0x188] sm:$0xff] %v521
  %622 = vst [vmem:[%s2 + $0x190] sm:$0xff] %v522
  %623 = vst [vmem:[%s2 + $0x198] sm:$0xff] %v523
  %624 = vst [vmem:[%s2 + $0x1a0] sm:$0xff] %v524
  %625 = vst [vmem:[%s2 + $0x1a8] sm:$0xff] %v525
  %626 = vst [vmem:[%s2 + $0x1b0] sm:$0xff] %v526
  %627 = vst [vmem:[%s2 + $0x1b8] sm:$0xff] %v527
  %628 = vst [vmem:[%s2 + $0x1c0] sm:$0xff] %v528
  %629 = vst [vmem:[%s2 + $0x1c8] sm:$0xff] %v529
  %630 = vst [vmem:[%s2 + $0x1d0] sm:$0xff] %v530
  %631 = vst [vmem:[%s2 + $0x1d8] sm:$0xff] %v531
  %632 = vst [vmem:[%s2 + $0x1e0] sm:$0xff] %v532
  %633 = vst [vmem:[%s2 + $0x1e8] sm:$0xff] %v533
  %634 = vst [vmem:[%s2 + $0x1f0] sm:$0xff] %v534
  %635 = vst [vmem:[%s2 + $0x1f8] sm:$0xff] %v535
  %636 = vst [vmem:[%s2 + $0x200] sm:$0xff] %v536
  %637 = vst [vmem:[%s2 + $0x208] sm:$0xff] %v537
  %638 = vst [vmem:[%s2 + $0x210] sm:$0xff] %v538
  %639 = vst [vmem:[%s2 + $0x218] sm:$0xff] %v539
  %640 = vst [vmem:[%s2 + $0x220] sm:$0xff] %v540
  %641 = vst [vmem:[%s2 + $0x228] sm:$0xff] %v541
  %642 = vst [vmem:[%s2 + $0x230] sm:$0xff] %v542
  %643 = vst [vmem:[%s2 + $0x238] sm:$0xff] %v543
  %644 = vst [vmem:[%s2 + $0x240] sm:$0xff] %v544
  %645 = vst [vmem:[%s2 + $0x248] sm:$0xff] %v545
  %646 = vst [vmem:[%s2 + $0x250] sm:$0xff] %v546
  %647 = vst [vmem:[%s2 + $0x258] sm:$0xff] %v547
  %648 = vst [vmem:[%s2 + $0x260] sm:$0xff] %v548
  %649 = vst [vmem:[%s2 + $0x268] sm:$0xff] %v549
  %650 = vst [vmem:[%s2 + $0x270] sm:$0xff] %v550
  %651 = vst [vmem:[%s2 + $0x278] sm:$0xff] %v551
  %652 = vst [vmem:[%s2 + $0x280] sm:$0xff] %v552
  %653 = vst [vmem:[%s2 + $0x288] sm:$0xff] %v553
  %654 = vst [vmem:[%s2 + $0x290] sm:$0xff] %v554
  %655 = vst [vmem:[%s2 + $0x298] sm:$0xff] %v555
  %656 = vst [vmem:[%s2 + $0x2a0] sm:$0xff] %v556
  %657 = vst [vmem:[%s2 + $0x2a8] sm:$0xff] %v557
  %658 = vst [vmem:[%s2 + $0x2b0] sm:$0xff] %v558
  %659 = vst [vmem:[%s2 + $0x2b8] sm:$0xff] %v559
  %660 = vst [vmem:[%s2 + $0x2c0] sm:$0xff] %v560
  %661 = vst [vmem:[%s2 + $0x2c8] sm:$0xff] %v561
  %662 = vst [vmem:[%s2 + $0x2d0] sm:$0xff] %v562
  %663 = vst [vmem:[%s2 + $0x2d8] sm:$0xff] %v563
  %664 = vst [vmem:[%s2 + $0x2e0] sm:$0xff] %v564
  %665 = vst [vmem:[%s2 + $0x2e8] sm:$0xff] %v565
  %666 = vst [vmem:[%s2 + $0x2f0] sm:$0xff] %v566
  %667 = vst [vmem:[%s2 + $0x2f8] sm:$0xff] %v567
  %668 = vst [vmem:[%s2 + $0x300] sm:$0xff] %v568
  %669 = vst [vmem:[%s2 + $0x308] sm:$0xff] %v569
  %670 = vst [vmem:[%s2 + $0x310] sm:$0xff] %v570
  %671 = vst [vmem:[%s2 + $0x318] sm:$0xff] %v571
  %v672 = vld [vmem:[%s221] sm:$0xff]
  %v673 = vld [vmem:[%s221 + $0x8] sm:$0xff]
  %v674 = vld [vmem:[%s221 + $0x10] sm:$0xff]
  %v675 = vld [vmem:[%s221 + $0x18] sm:$0xff]
  %v676 = vld [vmem:[%s221 + $0x20] sm:$0xff]
  %v677 = vld [vmem:[%s221 + $0x28] sm:$0xff]
  %v678 = vld [vmem:[%s221 + $0x30] sm:$0xff]
  %v679 = vld [vmem:[%s221 + $0x38] sm:$0xff]
  %v680 = vld [vmem:[%s221 + $0x40] sm:$0xff]
  %v681 = vld [vmem:[%s221 + $0x48] sm:$0xff]
  %v682 = vld [vmem:[%s221 + $0x50] sm:$0xff]
  %v683 = vld [vmem:[%s221 + $0x58] sm:$0xff]
  %v684 = vld [vmem:[%s221 + $0x60] sm:$0xff]
  %v685 = vld [vmem:[%s221 + $0x68] sm:$0xff]
  %v686 = vld [vmem:[%s221 + $0x70] sm:$0xff]
  %v687 = vld [vmem:[%s221 + $0x78] sm:$0xff]
  %v688 = vld [vmem:[%s221 + $0x80] sm:$0xff]
  %v689 = vld [vmem:[%s221 + $0x88] sm:$0xff]
  %v690 = vld [vmem:[%s221 + $0x90] sm:$0xff]
  %v691 = vld [vmem:[%s221 + $0x98] sm:$0xff]
  %v692 = vld [vmem:[%s221 + $0xa0] sm:$0xff]
  %v693 = vld [vmem:[%s221 + $0xa8] sm:$0xff]
  %v694 = vld [vmem:[%s221 + $0xb0] sm:$0xff]
  %v695 = vld [vmem:[%s221 + $0xb8] sm:$0xff]
  %v696 = vld [vmem:[%s221 + $0xc0] sm:$0xff]
  %v697 = vld [vmem:[%s221 + $0xc8] sm:$0xff]
  %v698 = vld [vmem:[%s221 + $0xd0] sm:$0xff]
  %v699 = vld [vmem:[%s221 + $0xd8] sm:$0xff]
  %v700 = vld [vmem:[%s221 + $0xe0] sm:$0xff]
  %v701 = vld [vmem:[%s221 + $0xe8] sm:$0xff]
  %v702 = vld [vmem:[%s221 + $0xf0] sm:$0xff]
  %v703 = vld [vmem:[%s221 + $0xf8] sm:$0xff]
  %v704 = vld [vmem:[%s221 + $0x100] sm:$0xff]
  %v705 = vld [vmem:[%s221 + $0x108] sm:$0xff]
  %v706 = vld [vmem:[%s221 + $0x110] sm:$0xff]
  %v707 = vld [vmem:[%s221 + $0x118] sm:$0xff]
  %v708 = vld [vmem:[%s221 + $0x120] sm:$0xff]
  %v709 = vld [vmem:[%s221 + $0x128] sm:$0xff]
  %v710 = vld [vmem:[%s221 + $0x130] sm:$0xff]
  %v711 = vld [vmem:[%s221 + $0x138] sm:$0xff]
  %v712 = vld [vmem:[%s221 + $0x140] sm:$0xff]
  %v713 = vld [vmem:[%s221 + $0x148] sm:$0xff]
  %v714 = vld [vmem:[%s221 + $0x150] sm:$0xff]
  %v715 = vld [vmem:[%s221 + $0x158] sm:$0xff]
  %v716 = vld [vmem:[%s221 + $0x160] sm:$0xff]
  %v717 = vld [vmem:[%s221 + $0x168] sm:$0xff]
  %v718 = vld [vmem:[%s221 + $0x170] sm:$0xff]
  %v719 = vld [vmem:[%s221 + $0x178] sm:$0xff]
  %v720 = vld [vmem:[%s221 + $0x180] sm:$0xff]
  %v721 = vld [vmem:[%s221 + $0x188] sm:$0xff]
  %v722 = vld [vmem:[%s221 + $0x190] sm:$0xff]
  %v723 = vld [vmem:[%s221 + $0x198] sm:$0xff]
  %v724 = vld [vmem:[%s221 + $0x1a0] sm:$0xff]
  %v725 = vld [vmem:[%s221 + $0x1a8] sm:$0xff]
  %v726 = vld [vmem:[%s221 + $0x1b0] sm:$0xff]
  %v727 = vld [vmem:[%s221 + $0x1b8] sm:$0xff]
  %v728 = vld [vmem:[%s221 + $0x1c0] sm:$0xff]
  %v729 = vld [vmem:[%s221 + $0x1c8] sm:$0xff]
  %v730 = vld [vmem:[%s221 + $0x1d0] sm:$0xff]
  %v731 = vld [vmem:[%s221 + $0x1d8] sm:$0xff]
  %v732 = vld [vmem:[%s221 + $0x1e0] sm:$0xff]
  %v733 = vld [vmem:[%s221 + $0x1e8] sm:$0xff]
  %v734 = vld [vmem:[%s221 + $0x1f0] sm:$0xff]
  %v735 = vld [vmem:[%s221 + $0x1f8] sm:$0xff]
  %v736 = vld [vmem:[%s221 + $0x200] sm:$0xff]
  %v737 = vld [vmem:[%s221 + $0x208] sm:$0xff]
  %v738 = vld [vmem:[%s221 + $0x210] sm:$0xff]
  %v739 = vld [vmem:[%s221 + $0x218] sm:$0xff]
  %v740 = vld [vmem:[%s221 + $0x220] sm:$0xff]
  %v741 = vld [vmem:[%s221 + $0x228] sm:$0xff]
  %v742 = vld [vmem:[%s221 + $0x230] sm:$0xff]
  %v743 = vld [vmem:[%s221 + $0x238] sm:$0xff]
  %v744 = vld [vmem:[%s221 + $0x240] sm:$0xff]
  %v745 = vld [vmem:[%s221 + $0x248] sm:$0xff]
  %v746 = vld [vmem:[%s221 + $0x250] sm:$0xff]
  %v747 = vld [vmem:[%s221 + $0x258] sm:$0xff]
  %v748 = vld [vmem:[%s221 + $0x260] sm:$0xff]
  %v749 = vld [vmem:[%s221 + $0x268] sm:$0xff]
  %v750 = vld [vmem:[%s221 + $0x270] sm:$0xff]
  %v751 = vld [vmem:[%s221 + $0x278] sm:$0xff]
  %v752 = vld [vmem:[%s221 + $0x280] sm:$0xff]
  %v753 = vld [vmem:[%s221 + $0x288] sm:$0xff]
  %v754 = vld [vmem:[%s221 + $0x290] sm:$0xff]
  %v755 = vld [vmem:[%s221 + $0x298] sm:$0xff]
  %v756 = vld [vmem:[%s221 + $0x2a0] sm:$0xff]
  %v757 = vld [vmem:[%s221 + $0x2a8] sm:$0xff]
  %v758 = vld [vmem:[%s221 + $0x2b0] sm:$0xff]
  %v759 = vld [vmem:[%s221 + $0x2b8] sm:$0xff]
  %v760 = vld [vmem:[%s221 + $0x2c0] sm:$0xff]
  %v761 = vld [vmem:[%s221 + $0x2c8] sm:$0xff]
  %v762 = vld [vmem:[%s221 + $0x2d0] sm:$0xff]
  %v763 = vld [vmem:[%s221 + $0x2d8] sm:$0xff]
  %v764 = vld [vmem:[%s221 + $0x2e0] sm:$0xff]
  %v765 = vld [vmem:[%s221 + $0x2e8] sm:$0xff]
  %v766 = vld [vmem:[%s221 + $0x2f0] sm:$0xff]
  %v767 = vld [vmem:[%s221 + $0x2f8] sm:$0xff]
  %v768 = vld [vmem:[%s221 + $0x300] sm:$0xff]
  %v769 = vld [vmem:[%s221 + $0x308] sm:$0xff]
  %v770 = vld [vmem:[%s221 + $0x310] sm:$0xff]
  %v771 = vld [vmem:[%s221 + $0x318] sm:$0xff]
  %v772 = vrot.slane %v467, 1
  %s773 = vtos %v772
  %v774 = vstv %s773
  %v776 = vmul.f32 %v672, %v774
  %v777 = vmul.f32 %v673, %v774
  %v778 = vmul.f32 %v674, %v774
  %v779 = vmul.f32 %v675, %v774
  %v780 = vmul.f32 %v676, %v774
  %v781 = vmul.f32 %v677, %v774
  %v782 = vmul.f32 %v678, %v774
  %v783 = vmul.f32 %v679, %v774
  %v784 = vmul.f32 %v680, %v774
  %v785 = vmul.f32 %v681, %v774
  %v786 = vmul.f32 %v682, %v774
  %v787 = vmul.f32 %v683, %v774
  %v788 = vmul.f32 %v684, %v774
  %v789 = vmul.f32 %v685, %v774
  %v790 = vmul.f32 %v686, %v774
  %v791 = vmul.f32 %v687, %v774
  %v792 = vmul.f32 %v688, %v774
  %v793 = vmul.f32 %v689, %v774
  %v794 = vmul.f32 %v690, %v774
  %v795 = vmul.f32 %v691, %v774
  %v796 = vmul.f32 %v692, %v774
  %v797 = vmul.f32 %v693, %v774
  %v798 = vmul.f32 %v694, %v774
  %v799 = vmul.f32 %v695, %v774
  %v800 = vmul.f32 %v696, %v774
  %v801 = vmul.f32 %v697, %v774
  %v802 = vmul.f32 %v698, %v774
  %v803 = vmul.f32 %v699, %v774
  %v804 = vmul.f32 %v700, %v774
  %v805 = vmul.f32 %v701, %v774
  %v806 = vmul.f32 %v702, %v774
  %v807 = vmul.f32 %v703, %v774
  %v808 = vmul.f32 %v704, %v774
  %v809 = vmul.f32 %v705, %v774
  %v810 = vmul.f32 %v706, %v774
  %v811 = vmul.f32 %v707, %v774
  %v812 = vmul.f32 %v708, %v774
  %v813 = vmul.f32 %v709, %v774
  %v814 = vmul.f32 %v710, %v774
  %v815 = vmul.f32 %v711, %v774
  %v816 = vmul.f32 %v712, %v774
  %v817 = vmul.f32 %v713, %v774
  %v818 = vmul.f32 %v714, %v774
  %v819 = vmul.f32 %v715, %v774
  %v820 = vmul.f32 %v716, %v774
  %v821 = vmul.f32 %v717, %v774
  %v822 = vmul.f32 %v718, %v774
  %v823 = vmul.f32 %v719, %v774
  %v824 = vmul.f32 %v720, %v774
  %v825 = vmul.f32 %v721, %v774
  %v826 = vmul.f32 %v722, %v774
  %v827 = vmul.f32 %v723, %v774
  %v828 = vmul.f32 %v724, %v774
  %v829 = vmul.f32 %v725, %v774
  %v830 = vmul.f32 %v726, %v774
  %v831 = vmul.f32 %v727, %v774
  %v832 = vmul.f32 %v728, %v774
  %v833 = vmul.f32 %v729, %v774
  %v834 = vmul.f32 %v730, %v774
  %v835 = vmul.f32 %v731, %v774
  %v836 = vmul.f32 %v732, %v774
  %v837 = vmul.f32 %v733, %v774
  %v838 = vmul.f32 %v734, %v774
  %v839 = vmul.f32 %v735, %v774
  %v840 = vmul.f32 %v736, %v774
  %v841 = vmul.f32 %v737, %v774
  %v842 = vmul.f32 %v738, %v774
  %v843 = vmul.f32 %v739, %v774
  %v844 = vmul.f32 %v740, %v774
  %v845 = vmul.f32 %v741, %v774
  %v846 = vmul.f32 %v742, %v774
  %v847 = vmul.f32 %v743, %v774
  %v848 = vmul.f32 %v744, %v774
  %v849 = vmul.f32 %v745, %v774
  %v850 = vmul.f32 %v746, %v774
  %v851 = vmul.f32 %v747, %v774
  %v852 = vmul.f32 %v748, %v774
  %v853 = vmul.f32 %v749, %v774
  %v854 = vmul.f32 %v750, %v774
  %v855 = vmul.f32 %v751, %v774
  %v856 = vmul.f32 %v752, %v774
  %v857 = vmul.f32 %v753, %v774
  %v858 = vmul.f32 %v754, %v774
  %v859 = vmul.f32 %v755, %v774
  %v860 = vmul.f32 %v756, %v774
  %v861 = vmul.f32 %v757, %v774
  %v862 = vmul.f32 %v758, %v774
  %v863 = vmul.f32 %v759, %v774
  %v864 = vmul.f32 %v760, %v774
  %v865 = vmul.f32 %v761, %v774
  %v866 = vmul.f32 %v762, %v774
  %v867 = vmul.f32 %v763, %v774
  %v868 = vmul.f32 %v764, %v774
  %v869 = vmul.f32 %v765, %v774
  %v870 = vmul.f32 %v766, %v774
  %v871 = vmul.f32 %v767, %v774
  %v872 = vmul.f32 %v768, %v774
  %v873 = vmul.f32 %v769, %v774
  %v874 = vmul.f32 %v770, %v774
  %v875 = vmul.f32 %v771, %v774
  %s876 = scalar_lea.vmem %s2, 800
  %877 = vst [vmem:[%s876] sm:$0xff] %v776
  %878 = vst [vmem:[%s876 + $0x8] sm:$0xff] %v777
  %879 = vst [vmem:[%s876 + $0x10] sm:$0xff] %v778
  %880 = vst [vmem:[%s876 + $0x18] sm:$0xff] %v779
  %881 = vst [vmem:[%s876 + $0x20] sm:$0xff] %v780
  %882 = vst [vmem:[%s876 + $0x28] sm:$0xff] %v781
  %883 = vst [vmem:[%s876 + $0x30] sm:$0xff] %v782
  %884 = vst [vmem:[%s876 + $0x38] sm:$0xff] %v783
  %885 = vst [vmem:[%s876 + $0x40] sm:$0xff] %v784
  %886 = vst [vmem:[%s876 + $0x48] sm:$0xff] %v785
  %887 = vst [vmem:[%s876 + $0x50] sm:$0xff] %v786
  %888 = vst [vmem:[%s876 + $0x58] sm:$0xff] %v787
  %889 = vst [vmem:[%s876 + $0x60] sm:$0xff] %v788
  %890 = vst [vmem:[%s876 + $0x68] sm:$0xff] %v789
  %891 = vst [vmem:[%s876 + $0x70] sm:$0xff] %v790
  %892 = vst [vmem:[%s876 + $0x78] sm:$0xff] %v791
  %893 = vst [vmem:[%s876 + $0x80] sm:$0xff] %v792
  %894 = vst [vmem:[%s876 + $0x88] sm:$0xff] %v793
  %895 = vst [vmem:[%s876 + $0x90] sm:$0xff] %v794
  %896 = vst [vmem:[%s876 + $0x98] sm:$0xff] %v795
  %897 = vst [vmem:[%s876 + $0xa0] sm:$0xff] %v796
  %898 = vst [vmem:[%s876 + $0xa8] sm:$0xff] %v797
  %899 = vst [vmem:[%s876 + $0xb0] sm:$0xff] %v798
  %900 = vst [vmem:[%s876 + $0xb8] sm:$0xff] %v799
  %901 = vst [vmem:[%s876 + $0xc0] sm:$0xff] %v800
  %902 = vst [vmem:[%s876 + $0xc8] sm:$0xff] %v801
  %903 = vst [vmem:[%s876 + $0xd0] sm:$0xff] %v802
  %904 = vst [vmem:[%s876 + $0xd8] sm:$0xff] %v803
  %905 = vst [vmem:[%s876 + $0xe0] sm:$0xff] %v804
  %906 = vst [vmem:[%s876 + $0xe8] sm:$0xff] %v805
  %907 = vst [vmem:[%s876 + $0xf0] sm:$0xff] %v806
  %908 = vst [vmem:[%s876 + $0xf8] sm:$0xff] %v807
  %909 = vst [vmem:[%s876 + $0x100] sm:$0xff] %v808
  %910 = vst [vmem:[%s876 + $0x108] sm:$0xff] %v809
  %911 = vst [vmem:[%s876 + $0x110] sm:$0xff] %v810
  %912 = vst [vmem:[%s876 + $0x118] sm:$0xff] %v811
  %913 = vst [vmem:[%s876 + $0x120] sm:$0xff] %v812
  %914 = vst [vmem:[%s876 + $0x128] sm:$0xff] %v813
  %915 = vst [vmem:[%s876 + $0x130] sm:$0xff] %v814
  %916 = vst [vmem:[%s876 + $0x138] sm:$0xff] %v815
  %917 = vst [vmem:[%s876 + $0x140] sm:$0xff] %v816
  %918 = vst [vmem:[%s876 + $0x148] sm:$0xff] %v817
  %919 = vst [vmem:[%s876 + $0x150] sm:$0xff] %v818
  %920 = vst [vmem:[%s876 + $0x158] sm:$0xff] %v819
  %921 = vst [vmem:[%s876 + $0x160] sm:$0xff] %v820
  %922 = vst [vmem:[%s876 + $0x168] sm:$0xff] %v821
  %923 = vst [vmem:[%s876 + $0x170] sm:$0xff] %v822
  %924 = vst [vmem:[%s876 + $0x178] sm:$0xff] %v823
  %925 = vst [vmem:[%s876 + $0x180] sm:$0xff] %v824
  %926 = vst [vmem:[%s876 + $0x188] sm:$0xff] %v825
  %927 = vst [vmem:[%s876 + $0x190] sm:$0xff] %v826
  %928 = vst [vmem:[%s876 + $0x198] sm:$0xff] %v827
  %929 = vst [vmem:[%s876 + $0x1a0] sm:$0xff] %v828
  %930 = vst [vmem:[%s876 + $0x1a8] sm:$0xff] %v829
  %931 = vst [vmem:[%s876 + $0x1b0] sm:$0xff] %v830
  %932 = vst [vmem:[%s876 + $0x1b8] sm:$0xff] %v831
  %933 = vst [vmem:[%s876 + $0x1c0] sm:$0xff] %v832
  %934 = vst [vmem:[%s876 + $0x1c8] sm:$0xff] %v833
  %935 = vst [vmem:[%s876 + $0x1d0] sm:$0xff] %v834
  %936 = vst [vmem:[%s876 + $0x1d8] sm:$0xff] %v835
  %937 = vst [vmem:[%s876 + $0x1e0] sm:$0xff] %v836
  %938 = vst [vmem:[%s876 + $0x1e8] sm:$0xff] %v837
  %939 = vst [vmem:[%s876 + $0x1f0] sm:$0xff] %v838
  %940 = vst [vmem:[%s876 + $0x1f8] sm:$0xff] %v839
  %941 = vst [vmem:[%s876 + $0x200] sm:$0xff] %v840
  %942 = vst [vmem:[%s876 + $0x208] sm:$0xff] %v841
  %943 = vst [vmem:[%s876 + $0x210] sm:$0xff] %v842
  %944 = vst [vmem:[%s876 + $0x218] sm:$0xff] %v843
  %945 = vst [vmem:[%s876 + $0x220] sm:$0xff] %v844
  %946 = vst [vmem:[%s876 + $0x228] sm:$0xff] %v845
  %947 = vst [vmem:[%s876 + $0x230] sm:$0xff] %v846
  %948 = vst [vmem:[%s876 + $0x238] sm:$0xff] %v847
  %949 = vst [vmem:[%s876 + $0x240] sm:$0xff] %v848
  %950 = vst [vmem:[%s876 + $0x248] sm:$0xff] %v849
  %951 = vst [vmem:[%s876 + $0x250] sm:$0xff] %v850
  %952 = vst [vmem:[%s876 + $0x258] sm:$0xff] %v851
  %953 = vst [vmem:[%s876 + $0x260] sm:$0xff] %v852
  %954 = vst [vmem:[%s876 + $0x268] sm:$0xff] %v853
  %955 = vst [vmem:[%s876 + $0x270] sm:$0xff] %v854
  %956 = vst [vmem:[%s876 + $0x278] sm:$0xff] %v855
  %957 = vst [vmem:[%s876 + $0x280] sm:$0xff] %v856
  %958 = vst [vmem:[%s876 + $0x288] sm:$0xff] %v857
  %959 = vst [vmem:[%s876 + $0x290] sm:$0xff] %v858
  %960 = vst [vmem:[%s876 + $0x298] sm:$0xff] %v859
  %961 = vst [vmem:[%s876 + $0x2a0] sm:$0xff] %v860
  %962 = vst [vmem:[%s876 + $0x2a8] sm:$0xff] %v861
  %963 = vst [vmem:[%s876 + $0x2b0] sm:$0xff] %v862
  %964 = vst [vmem:[%s876 + $0x2b8] sm:$0xff] %v863
  %965 = vst [vmem:[%s876 + $0x2c0] sm:$0xff] %v864
  %966 = vst [vmem:[%s876 + $0x2c8] sm:$0xff] %v865
  %967 = vst [vmem:[%s876 + $0x2d0] sm:$0xff] %v866
  %968 = vst [vmem:[%s876 + $0x2d8] sm:$0xff] %v867
  %969 = vst [vmem:[%s876 + $0x2e0] sm:$0xff] %v868
  %970 = vst [vmem:[%s876 + $0x2e8] sm:$0xff] %v869
  %971 = vst [vmem:[%s876 + $0x2f0] sm:$0xff] %v870
  %972 = vst [vmem:[%s876 + $0x2f8] sm:$0xff] %v871
  %973 = vst [vmem:[%s876 + $0x300] sm:$0xff] %v872
  %974 = vst [vmem:[%s876 + $0x308] sm:$0xff] %v873
  %975 = vst [vmem:[%s876 + $0x310] sm:$0xff] %v874
  %976 = vst [vmem:[%s876 + $0x318] sm:$0xff] %v875
  // Predicated region
  $region10: #{se_block_forward.1} parent=0 // pred_check
    _
  $region11: #{se_block_forward.1} parent=0 // pred_check_branch
    %978 = sbr.rel (0) target = $region13
  $region12: #{se_block_forward.1} parent=0 // pred_region
    _
  $region13: #{se_block_forward.1} parent=0 // pred_fallthru
    _
  // Predicated region
  $region14: #{se_block_forward.1} parent=0 // pred_check
    _
  $region15: #{se_block_forward.1} parent=0 // pred_check_branch
    %980 = sbr.rel (0) target = $region17
  $region16: #{se_block_forward.1} parent=0 // pred_region
    _
  $region17: #{se_block_forward.1} parent=0 // pred_fallthru
    _

</llo_original>
